<compile_context>
chip_gen: v7x
topology: tpu7x:2x2x1
jax: 0.10.0
libtpu: 0.0.40
codegen_flags: <defaults>
</compile_context>

<pallas_src>
import functools

import jax
import jax.numpy as jnp
from jax import lax
from jax.experimental import pallas as pl
from jax.experimental.pallas import tpu as pltpu


# --------------------------------------------------------------------------
# Kernel body (shared by 'none' and 'soft')
# --------------------------------------------------------------------------
def _gather_body(r_idx_ref, r_w_ref, kv_ref, out_ref, *, p2, group, topk, soft):
    # r_idx_ref: SMEM (n*p2*topk,) int32   (scalar prefetch)
    # r_w_ref  : SMEM (n*p2*topk,) float32 (soft mode only, else None)
    # kv_ref   : VMEM (1, p2, row)         (kv[b] slab, resident across j)
    # out_ref  : VMEM (1, group*topk, row) (pipelined output block)
    b = pl.program_id(0)
    j = pl.program_id(1)
    gt = group * topk
    base = (b * p2 + j * group) * topk

    def copy_one(m):
        idx = r_idx_ref[base + m]
        rowv = kv_ref[0, pl.ds(idx, 1), :]              # (1, row) dynamic-row load
        if soft:
            rowv = rowv.astype(jnp.float32) * r_w_ref[base + m]
        out_ref[0, pl.ds(m, 1), :] = rowv.astype(out_ref.dtype)

    if gt <= 64:
        for m in range(gt):                              # static unroll
            copy_one(m)
    else:
        def body(m, carry):
            copy_one(m)
            return carry
        lax.fori_loop(0, gt, body, 0, unroll=8)


def _kv_gather_none_kernel(r_idx_ref, kv_ref, out_ref, *, p2, group, topk):
    _gather_body(r_idx_ref, None, kv_ref, out_ref,
                 p2=p2, group=group, topk=topk, soft=False)


def _kv_gather_soft_kernel(r_idx_ref, r_w_ref, kv_ref, out_ref, *, p2, group, topk):
    _gather_body(r_idx_ref, r_w_ref, kv_ref, out_ref,
                 p2=p2, group=group, topk=topk, soft=True)


# --------------------------------------------------------------------------
# Wrapper
# --------------------------------------------------------------------------
def _choose_group(p2, topk):
    """Windows gathered per grid step along p2.

    Pick a divisor T of p2 with T*topk a multiple of 8 (sublane-dense output
    block), preferring >= 32 gathered rows per step to amortise grid-step
    overhead.  Fallback: T == p2 (full-extent block, always layout-legal).
    """
    best = p2
    found = False
    for t in range(1, p2):
        if p2 % t:
            continue
        if (t * topk) % 8:
            continue
        best, found = t, True
        if t * topk >= 32:
            break
    return best if found or best == p2 else p2


def kv_gather(r_idx, r_weight, kv, mul_weight="none"):
    assert mul_weight in ("none", "soft", "hard")
    if mul_weight == "hard":
        # TODO(synk): differentiable hard routing not implemented in the
        # reference PyTorch module either (raises NotImplementedError).
        raise NotImplementedError("differentiable hard routing TBA")

    n, p2, w2, c_kv = kv.shape
    topk = r_idx.shape[-1]
    row = w2 * c_kv
    soft = mul_weight == "soft"

    # Lane-dense layout: fold (w2, c_kv) -> row (contiguous, free reshape).
    kv_flat = kv.reshape(n, p2, row)
    # 1-D int32 index table (avoids SMEM 2-D padding blow-up); clamp
    # defensively so a bad index cannot read out of the kv[b] slab.
    r_idx_flat = jnp.clip(r_idx.astype(jnp.int32), 0, p2 - 1).reshape(-1)

    group = _choose_group(p2, topk)
    grid = (n, p2 // group)

    out_dtype = jnp.result_type(kv.dtype, jnp.float32) if soft else kv.dtype

    kv_spec = pl.BlockSpec((1, p2, row), lambda b, j, r_idx: (b, 0, 0))
    out_spec = pl.BlockSpec((1, group * topk, row), lambda b, j, r_idx: (b, j, 0))

    kv_bytes = jnp.dtype(kv.dtype).itemsize
    out_bytes = jnp.dtype(out_dtype).itemsize
    # kv[b] slab + output block, both double-buffered by the pipeline.
    vmem_need = (2 * p2 * row * kv_bytes
                 + 2 * group * topk * row * out_bytes + (2 << 20))
    # Clamp below v7x's 64 MiB physical VMEM.
    vmem_limit = int(min(max(vmem_need, 32 << 20), 56 << 20))

    read_bytes = n * p2 * row * kv_bytes + r_idx_flat.size * 4
    write_bytes = n * p2 * topk * row * out_bytes
    cost = pl.CostEstimate(
        flops=(n * p2 * topk * row) if soft else 0,
        transcendentals=0,
        bytes_accessed=read_bytes + write_bytes,
    )
    compiler_params = pltpu.CompilerParams(
        # No cross-step dependencies: both axes shardable across TensorCores.
        dimension_semantics=("parallel", "parallel"),
        vmem_limit_bytes=vmem_limit,
    )

    if not soft:
        out_flat = pl.pallas_call(
            functools.partial(_kv_gather_none_kernel,
                              p2=p2, group=group, topk=topk),
            out_shape=jax.ShapeDtypeStruct((n, p2 * topk, row), out_dtype),
            grid_spec=pltpu.PrefetchScalarGridSpec(
                num_scalar_prefetch=1,           # r_idx -> SMEM
                grid=grid,
                in_specs=[kv_spec],
                out_specs=out_spec,
            ),
            compiler_params=compiler_params,
            cost_estimate=cost,
        )(r_idx_flat, kv_flat)
    else:
        r_w_flat = r_weight.astype(jnp.float32).reshape(-1)
        out_flat = pl.pallas_call(
            functools.partial(_kv_gather_soft_kernel,
                              p2=p2, group=group, topk=topk),
            out_shape=jax.ShapeDtypeStruct((n, p2 * topk, row), out_dtype),
            grid_spec=pltpu.PrefetchScalarGridSpec(
                num_scalar_prefetch=1,           # r_idx -> SMEM
                grid=grid,
                in_specs=[
                    # flattened weights resident in SMEM (no per-step DMA)
                    pl.BlockSpec(memory_space=pltpu.MemorySpace.SMEM),
                    kv_spec,
                ],
                out_specs=out_spec,
            ),
            compiler_params=compiler_params,
            cost_estimate=cost,
        )(r_idx_flat, r_w_flat, kv_flat)

    return out_flat.reshape(n, p2, topk, w2, c_kv)


def kv_gather_ref(r_idx, r_weight, kv, mul_weight="none"):
    n = kv.shape[0]
    gathered = kv[jnp.arange(n)[:, None, None], r_idx]  # (n, p2, topk, w2, c_kv)
    if mul_weight == "soft":
        gathered = r_weight[..., None, None] * gathered
    return gathered


if __name__ == "__main__":
    key = jax.random.PRNGKey(0)
    k_idx, k_w, k_kv = jax.random.split(key, 3)

    # Small shapes consistent with the module: n batch regions, p2 windows,
    # w2 tokens per window, c_kv channels, topk routed windows.
    n, p2, w2, c_kv, topk = 2, 16, 8, 32, 4

    r_idx = jax.random.randint(k_idx, (n, p2, topk), 0, p2, dtype=jnp.int32)
    r_weight = jax.nn.softmax(jax.random.normal(k_w, (n, p2, topk)), axis=-1)
    kv = jax.random.normal(k_kv, (n, p2, w2, c_kv), dtype=jnp.float32)

    for mode in ("none", "soft"):
        out = jax.block_until_ready(kv_gather(r_idx, r_weight, kv, mul_weight=mode))
        ref = kv_gather_ref(r_idx, r_weight, kv, mul_weight=mode)
        assert out.shape == (n, p2, topk, w2, c_kv), out.shape
        assert jnp.allclose(out, ref, atol=1e-6, rtol=1e-6), f"mismatch in mode={mode}"

    print("KERNEL_OK")
</pallas_src>

<mosaic_0001>
module attributes {stable_mosaic.version = 11 : i64} {
  func.func @_kv_gather_none_kernel(%arg0: i32, %arg1: i32, %arg2: memref<128xi32, #tpu.memory_space<smem>>, %arg3: memref<1x16x256xf32, #tpu.memory_space<vmem>>, %arg4: memref<1x32x256xf32, #tpu.memory_space<vmem>>) attributes {dimension_semantics = [#tpu.dimension_semantics<parallel>, #tpu.dimension_semantics<parallel>], iteration_bounds = array<i64: 2, 2>, scalar_prefetch = 1 : i64, scratch_operands = 0 : i64, tpu.core_type = #tpu.core_type<tc>, window_params = [{transform_indices = @transform_0, window_bounds = array<i64: 1, 16, 256>}, {transform_indices = @transform_1, window_bounds = array<i64: 1, 32, 256>}]} {
    %c16_i32 = arith.constant 16 : i32
    %0 = arith.muli %arg0, %c16_i32 : i32
    %c8_i32 = arith.constant 8 : i32
    %1 = arith.muli %arg1, %c8_i32 : i32
    %2 = arith.addi %0, %1 : i32
    %c4_i32 = arith.constant 4 : i32
    %3 = arith.muli %2, %c4_i32 : i32
    %c0_i32 = arith.constant 0 : i32
    %4 = arith.addi %3, %c0_i32 : i32
    %5 = arith.index_cast %4 : i32 to index
    %6 = memref.load %arg2[%5] : memref<128xi32, #tpu.memory_space<smem>>
    %c0 = arith.constant 0 : index
    %7 = arith.index_cast %6 : i32 to index
    %c0_0 = arith.constant 0 : index
    %8 = vector.load %arg3[%c0, %7, %c0_0] : memref<1x16x256xf32, #tpu.memory_space<vmem>>, vector<1x1x256xf32>
    %9 = vector.shape_cast %8 : vector<1x1x256xf32> to vector<1x256xf32>
    %c0_1 = arith.constant 0 : index
    %c0_2 = arith.constant 0 : index
    %c0_3 = arith.constant 0 : index
    %10 = vector.load %arg4[%c0_1, %c0_2, %c0_3] : memref<1x32x256xf32, #tpu.memory_space<vmem>>, vector<1x1x256xf32>
    %11 = vector.shape_cast %10 : vector<1x1x256xf32> to vector<1x256xf32>
    %12 = vector.shape_cast %9 : vector<1x256xf32> to vector<1x1x256xf32>
    tpu.vector_store %arg4[%c0_1, %c0_2, %c0_3], %12 {strides = array<i32>} : memref<1x32x256xf32, #tpu.memory_space<vmem>>, vector<1x1x256xf32>,
    %c1_i32 = arith.constant 1 : i32
    %13 = arith.addi %3, %c1_i32 : i32
    %14 = arith.index_cast %13 : i32 to index
    %15 = memref.load %arg2[%14] : memref<128xi32, #tpu.memory_space<smem>>
    %c0_4 = arith.constant 0 : index
    %16 = arith.index_cast %15 : i32 to index
    %c0_5 = arith.constant 0 : index
    %17 = vector.load %arg3[%c0_4, %16, %c0_5] : memref<1x16x256xf32, #tpu.memory_space<vmem>>, vector<1x1x256xf32>
    %18 = vector.shape_cast %17 : vector<1x1x256xf32> to vector<1x256xf32>
    %c0_6 = arith.constant 0 : index
    %c1 = arith.constant 1 : index
    %c0_7 = arith.constant 0 : index
    %19 = vector.load %arg4[%c0_6, %c1, %c0_7] : memref<1x32x256xf32, #tpu.memory_space<vmem>>, vector<1x1x256xf32>
    %20 = vector.shape_cast %19 : vector<1x1x256xf32> to vector<1x256xf32>
    %21 = vector.shape_cast %18 : vector<1x256xf32> to vector<1x1x256xf32>
    tpu.vector_store %arg4[%c0_6, %c1, %c0_7], %21 {strides = array<i32>} : memref<1x32x256xf32, #tpu.memory_space<vmem>>, vector<1x1x256xf32>,
    %c2_i32 = arith.constant 2 : i32
    %22 = arith.addi %3, %c2_i32 : i32
    %23 = arith.index_cast %22 : i32 to index
    %24 = memref.load %arg2[%23] : memref<128xi32, #tpu.memory_space<smem>>
    %c0_8 = arith.constant 0 : index
    %25 = arith.index_cast %24 : i32 to index
    %c0_9 = arith.constant 0 : index
    %26 = vector.load %arg3[%c0_8, %25, %c0_9] : memref<1x16x256xf32, #tpu.memory_space<vmem>>, vector<1x1x256xf32>
    %27 = vector.shape_cast %26 : vector<1x1x256xf32> to vector<1x256xf32>
    %c0_10 = arith.constant 0 : index
    %c2 = arith.constant 2 : index
    %c0_11 = arith.constant 0 : index
    %28 = vector.load %arg4[%c0_10, %c2, %c0_11] : memref<1x32x256xf32, #tpu.memory_space<vmem>>, vector<1x1x256xf32>
    %29 = vector.shape_cast %28 : vector<1x1x256xf32> to vector<1x256xf32>
    %30 = vector.shape_cast %27 : vector<1x256xf32> to vector<1x1x256xf32>
    tpu.vector_store %arg4[%c0_10, %c2, %c0_11], %30 {strides = array<i32>} : memref<1x32x256xf32, #tpu.memory_space<vmem>>, vector<1x1x256xf32>,
    %c3_i32 = arith.constant 3 : i32
    %31 = arith.addi %3, %c3_i32 : i32
    %32 = arith.index_cast %31 : i32 to index
    %33 = memref.load %arg2[%32] : memref<128xi32, #tpu.memory_space<smem>>
    %c0_12 = arith.constant 0 : index
    %34 = arith.index_cast %33 : i32 to index
    %c0_13 = arith.constant 0 : index
    %35 = vector.load %arg3[%c0_12, %34, %c0_13] : memref<1x16x256xf32, #tpu.memory_space<vmem>>, vector<1x1x256xf32>
    %36 = vector.shape_cast %35 : vector<1x1x256xf32> to vector<1x256xf32>
    %c0_14 = arith.constant 0 : index
    %c3 = arith.constant 3 : index
    %c0_15 = arith.constant 0 : index
    %37 = vector.load %arg4[%c0_14, %c3, %c0_15] : memref<1x32x256xf32, #tpu.memory_space<vmem>>, vector<1x1x256xf32>
    %38 = vector.shape_cast %37 : vector<1x1x256xf32> to vector<1x256xf32>
    %39 = vector.shape_cast %36 : vector<1x256xf32> to vector<1x1x256xf32>
    tpu.vector_store %arg4[%c0_14, %c3, %c0_15], %39 {strides = array<i32>} : memref<1x32x256xf32, #tpu.memory_space<vmem>>, vector<1x1x256xf32>,
    %c4_i32_16 = arith.constant 4 : i32
    %40 = arith.addi %3, %c4_i32_16 : i32
    %41 = arith.index_cast %40 : i32 to index
    %42 = memref.load %arg2[%41] : memref<128xi32, #tpu.memory_space<smem>>
    %c0_17 = arith.constant 0 : index
    %43 = arith.index_cast %42 : i32 to index
    %c0_18 = arith.constant 0 : index
    %44 = vector.load %arg3[%c0_17, %43, %c0_18] : memref<1x16x256xf32, #tpu.memory_space<vmem>>, vector<1x1x256xf32>
    %45 = vector.shape_cast %44 : vector<1x1x256xf32> to vector<1x256xf32>
    %c0_19 = arith.constant 0 : index
    %c4 = arith.constant 4 : index
    %c0_20 = arith.constant 0 : index
    %46 = vector.load %arg4[%c0_19, %c4, %c0_20] : memref<1x32x256xf32, #tpu.memory_space<vmem>>, vector<1x1x256xf32>
    %47 = vector.shape_cast %46 : vector<1x1x256xf32> to vector<1x256xf32>
    %48 = vector.shape_cast %45 : vector<1x256xf32> to vector<1x1x256xf32>
    tpu.vector_store %arg4[%c0_19, %c4, %c0_20], %48 {strides = array<i32>} : memref<1x32x256xf32, #tpu.memory_space<vmem>>, vector<1x1x256xf32>,
    %c5_i32 = arith.constant 5 : i32
    %49 = arith.addi %3, %c5_i32 : i32
    %50 = arith.index_cast %49 : i32 to index
    %51 = memref.load %arg2[%50] : memref<128xi32, #tpu.memory_space<smem>>
    %c0_21 = arith.constant 0 : index
    %52 = arith.index_cast %51 : i32 to index
    %c0_22 = arith.constant 0 : index
    %53 = vector.load %arg3[%c0_21, %52, %c0_22] : memref<1x16x256xf32, #tpu.memory_space<vmem>>, vector<1x1x256xf32>
    %54 = vector.shape_cast %53 : vector<1x1x256xf32> to vector<1x256xf32>
    %c0_23 = arith.constant 0 : index
    %c5 = arith.constant 5 : index
    %c0_24 = arith.constant 0 : index
    %55 = vector.load %arg4[%c0_23, %c5, %c0_24] : memref<1x32x256xf32, #tpu.memory_space<vmem>>, vector<1x1x256xf32>
    %56 = vector.shape_cast %55 : vector<1x1x256xf32> to vector<1x256xf32>
    %57 = vector.shape_cast %54 : vector<1x256xf32> to vector<1x1x256xf32>
    tpu.vector_store %arg4[%c0_23, %c5, %c0_24], %57 {strides = array<i32>} : memref<1x32x256xf32, #tpu.memory_space<vmem>>, vector<1x1x256xf32>,
    %c6_i32 = arith.constant 6 : i32
    %58 = arith.addi %3, %c6_i32 : i32
    %59 = arith.index_cast %58 : i32 to index
    %60 = memref.load %arg2[%59] : memref<128xi32, #tpu.memory_space<smem>>
    %c0_25 = arith.constant 0 : index
    %61 = arith.index_cast %60 : i32 to index
    %c0_26 = arith.constant 0 : index
    %62 = vector.load %arg3[%c0_25, %61, %c0_26] : memref<1x16x256xf32, #tpu.memory_space<vmem>>, vector<1x1x256xf32>
    %63 = vector.shape_cast %62 : vector<1x1x256xf32> to vector<1x256xf32>
    %c0_27 = arith.constant 0 : index
    %c6 = arith.constant 6 : index
    %c0_28 = arith.constant 0 : index
    %64 = vector.load %arg4[%c0_27, %c6, %c0_28] : memref<1x32x256xf32, #tpu.memory_space<vmem>>, vector<1x1x256xf32>
    %65 = vector.shape_cast %64 : vector<1x1x256xf32> to vector<1x256xf32>
    %66 = vector.shape_cast %63 : vector<1x256xf32> to vector<1x1x256xf32>
    tpu.vector_store %arg4[%c0_27, %c6, %c0_28], %66 {strides = array<i32>} : memref<1x32x256xf32, #tpu.memory_space<vmem>>, vector<1x1x256xf32>,
    %c7_i32 = arith.constant 7 : i32
    %67 = arith.addi %3, %c7_i32 : i32
    %68 = arith.index_cast %67 : i32 to index
    %69 = memref.load %arg2[%68] : memref<128xi32, #tpu.memory_space<smem>>
    %c0_29 = arith.constant 0 : index
    %70 = arith.index_cast %69 : i32 to index
    %c0_30 = arith.constant 0 : index
    %71 = vector.load %arg3[%c0_29, %70, %c0_30] : memref<1x16x256xf32, #tpu.memory_space<vmem>>, vector<1x1x256xf32>
    %72 = vector.shape_cast %71 : vector<1x1x256xf32> to vector<1x256xf32>
    %c0_31 = arith.constant 0 : index
    %c7 = arith.constant 7 : index
    %c0_32 = arith.constant 0 : index
    %73 = vector.load %arg4[%c0_31, %c7, %c0_32] : memref<1x32x256xf32, #tpu.memory_space<vmem>>, vector<1x1x256xf32>
    %74 = vector.shape_cast %73 : vector<1x1x256xf32> to vector<1x256xf32>
    %75 = vector.shape_cast %72 : vector<1x256xf32> to vector<1x1x256xf32>
    tpu.vector_store %arg4[%c0_31, %c7, %c0_32], %75 {strides = array<i32>} : memref<1x32x256xf32, #tpu.memory_space<vmem>>, vector<1x1x256xf32>,
    %c8_i32_33 = arith.constant 8 : i32
    %76 = arith.addi %3, %c8_i32_33 : i32
    %77 = arith.index_cast %76 : i32 to index
    %78 = memref.load %arg2[%77] : memref<128xi32, #tpu.memory_space<smem>>
    %c0_34 = arith.constant 0 : index
    %79 = arith.index_cast %78 : i32 to index
    %c0_35 = arith.constant 0 : index
    %80 = vector.load %arg3[%c0_34, %79, %c0_35] : memref<1x16x256xf32, #tpu.memory_space<vmem>>, vector<1x1x256xf32>
    %81 = vector.shape_cast %80 : vector<1x1x256xf32> to vector<1x256xf32>
    %c0_36 = arith.constant 0 : index
    %c8 = arith.constant 8 : index
    %c0_37 = arith.constant 0 : index
    %82 = vector.load %arg4[%c0_36, %c8, %c0_37] : memref<1x32x256xf32, #tpu.memory_space<vmem>>, vector<1x1x256xf32>
    %83 = vector.shape_cast %82 : vector<1x1x256xf32> to vector<1x256xf32>
    %84 = vector.shape_cast %81 : vector<1x256xf32> to vector<1x1x256xf32>
    tpu.vector_store %arg4[%c0_36, %c8, %c0_37], %84 {strides = array<i32>} : memref<1x32x256xf32, #tpu.memory_space<vmem>>, vector<1x1x256xf32>,
    %c9_i32 = arith.constant 9 : i32
    %85 = arith.addi %3, %c9_i32 : i32
    %86 = arith.index_cast %85 : i32 to index
    %87 = memref.load %arg2[%86] : memref<128xi32, #tpu.memory_space<smem>>
    %c0_38 = arith.constant 0 : index
    %88 = arith.index_cast %87 : i32 to index
    %c0_39 = arith.constant 0 : index
    %89 = vector.load %arg3[%c0_38, %88, %c0_39] : memref<1x16x256xf32, #tpu.memory_space<vmem>>, vector<1x1x256xf32>
    %90 = vector.shape_cast %89 : vector<1x1x256xf32> to vector<1x256xf32>
    %c0_40 = arith.constant 0 : index
    %c9 = arith.constant 9 : index
    %c0_41 = arith.constant 0 : index
    %91 = vector.load %arg4[%c0_40, %c9, %c0_41] : memref<1x32x256xf32, #tpu.memory_space<vmem>>, vector<1x1x256xf32>
    %92 = vector.shape_cast %91 : vector<1x1x256xf32> to vector<1x256xf32>
    %93 = vector.shape_cast %90 : vector<1x256xf32> to vector<1x1x256xf32>
    tpu.vector_store %arg4[%c0_40, %c9, %c0_41], %93 {strides = array<i32>} : memref<1x32x256xf32, #tpu.memory_space<vmem>>, vector<1x1x256xf32>,
    %c10_i32 = arith.constant 10 : i32
    %94 = arith.addi %3, %c10_i32 : i32
    %95 = arith.index_cast %94 : i32 to index
    %96 = memref.load %arg2[%95] : memref<128xi32, #tpu.memory_space<smem>>
    %c0_42 = arith.constant 0 : index
    %97 = arith.index_cast %96 : i32 to index
    %c0_43 = arith.constant 0 : index
    %98 = vector.load %arg3[%c0_42, %97, %c0_43] : memref<1x16x256xf32, #tpu.memory_space<vmem>>, vector<1x1x256xf32>
    %99 = vector.shape_cast %98 : vector<1x1x256xf32> to vector<1x256xf32>
    %c0_44 = arith.constant 0 : index
    %c10 = arith.constant 10 : index
    %c0_45 = arith.constant 0 : index
    %100 = vector.load %arg4[%c0_44, %c10, %c0_45] : memref<1x32x256xf32, #tpu.memory_space<vmem>>, vector<1x1x256xf32>
    %101 = vector.shape_cast %100 : vector<1x1x256xf32> to vector<1x256xf32>
    %102 = vector.shape_cast %99 : vector<1x256xf32> to vector<1x1x256xf32>
    tpu.vector_store %arg4[%c0_44, %c10, %c0_45], %102 {strides = array<i32>} : memref<1x32x256xf32, #tpu.memory_space<vmem>>, vector<1x1x256xf32>,
    %c11_i32 = arith.constant 11 : i32
    %103 = arith.addi %3, %c11_i32 : i32
    %104 = arith.index_cast %103 : i32 to index
    %105 = memref.load %arg2[%104] : memref<128xi32, #tpu.memory_space<smem>>
    %c0_46 = arith.constant 0 : index
    %106 = arith.index_cast %105 : i32 to index
    %c0_47 = arith.constant 0 : index
    %107 = vector.load %arg3[%c0_46, %106, %c0_47] : memref<1x16x256xf32, #tpu.memory_space<vmem>>, vector<1x1x256xf32>
    %108 = vector.shape_cast %107 : vector<1x1x256xf32> to vector<1x256xf32>
    %c0_48 = arith.constant 0 : index
    %c11 = arith.constant 11 : index
    %c0_49 = arith.constant 0 : index
    %109 = vector.load %arg4[%c0_48, %c11, %c0_49] : memref<1x32x256xf32, #tpu.memory_space<vmem>>, vector<1x1x256xf32>
    %110 = vector.shape_cast %109 : vector<1x1x256xf32> to vector<1x256xf32>
    %111 = vector.shape_cast %108 : vector<1x256xf32> to vector<1x1x256xf32>
    tpu.vector_store %arg4[%c0_48, %c11, %c0_49], %111 {strides = array<i32>} : memref<1x32x256xf32, #tpu.memory_space<vmem>>, vector<1x1x256xf32>,
    %c12_i32 = arith.constant 12 : i32
    %112 = arith.addi %3, %c12_i32 : i32
    %113 = arith.index_cast %112 : i32 to index
    %114 = memref.load %arg2[%113] : memref<128xi32, #tpu.memory_space<smem>>
    %c0_50 = arith.constant 0 : index
    %115 = arith.index_cast %114 : i32 to index
    %c0_51 = arith.constant 0 : index
    %116 = vector.load %arg3[%c0_50, %115, %c0_51] : memref<1x16x256xf32, #tpu.memory_space<vmem>>, vector<1x1x256xf32>
    %117 = vector.shape_cast %116 : vector<1x1x256xf32> to vector<1x256xf32>
    %c0_52 = arith.constant 0 : index
    %c12 = arith.constant 12 : index
    %c0_53 = arith.constant 0 : index
    %118 = vector.load %arg4[%c0_52, %c12, %c0_53] : memref<1x32x256xf32, #tpu.memory_space<vmem>>, vector<1x1x256xf32>
    %119 = vector.shape_cast %118 : vector<1x1x256xf32> to vector<1x256xf32>
    %120 = vector.shape_cast %117 : vector<1x256xf32> to vector<1x1x256xf32>
    tpu.vector_store %arg4[%c0_52, %c12, %c0_53], %120 {strides = array<i32>} : memref<1x32x256xf32, #tpu.memory_space<vmem>>, vector<1x1x256xf32>,
    %c13_i32 = arith.constant 13 : i32
    %121 = arith.addi %3, %c13_i32 : i32
    %122 = arith.index_cast %121 : i32 to index
    %123 = memref.load %arg2[%122] : memref<128xi32, #tpu.memory_space<smem>>
    %c0_54 = arith.constant 0 : index
    %124 = arith.index_cast %123 : i32 to index
    %c0_55 = arith.constant 0 : index
    %125 = vector.load %arg3[%c0_54, %124, %c0_55] : memref<1x16x256xf32, #tpu.memory_space<vmem>>, vector<1x1x256xf32>
    %126 = vector.shape_cast %125 : vector<1x1x256xf32> to vector<1x256xf32>
    %c0_56 = arith.constant 0 : index
    %c13 = arith.constant 13 : index
    %c0_57 = arith.constant 0 : index
    %127 = vector.load %arg4[%c0_56, %c13, %c0_57] : memref<1x32x256xf32, #tpu.memory_space<vmem>>, vector<1x1x256xf32>
    %128 = vector.shape_cast %127 : vector<1x1x256xf32> to vector<1x256xf32>
    %129 = vector.shape_cast %126 : vector<1x256xf32> to vector<1x1x256xf32>
    tpu.vector_store %arg4[%c0_56, %c13, %c0_57], %129 {strides = array<i32>} : memref<1x32x256xf32, #tpu.memory_space<vmem>>, vector<1x1x256xf32>,
    %c14_i32 = arith.constant 14 : i32
    %130 = arith.addi %3, %c14_i32 : i32
    %131 = arith.index_cast %130 : i32 to index
    %132 = memref.load %arg2[%131] : memref<128xi32, #tpu.memory_space<smem>>
    %c0_58 = arith.constant 0 : index
    %133 = arith.index_cast %132 : i32 to index
    %c0_59 = arith.constant 0 : index
    %134 = vector.load %arg3[%c0_58, %133, %c0_59] : memref<1x16x256xf32, #tpu.memory_space<vmem>>, vector<1x1x256xf32>
    %135 = vector.shape_cast %134 : vector<1x1x256xf32> to vector<1x256xf32>
    %c0_60 = arith.constant 0 : index
    %c14 = arith.constant 14 : index
    %c0_61 = arith.constant 0 : index
    %136 = vector.load %arg4[%c0_60, %c14, %c0_61] : memref<1x32x256xf32, #tpu.memory_space<vmem>>, vector<1x1x256xf32>
    %137 = vector.shape_cast %136 : vector<1x1x256xf32> to vector<1x256xf32>
    %138 = vector.shape_cast %135 : vector<1x256xf32> to vector<1x1x256xf32>
    tpu.vector_store %arg4[%c0_60, %c14, %c0_61], %138 {strides = array<i32>} : memref<1x32x256xf32, #tpu.memory_space<vmem>>, vector<1x1x256xf32>,
    %c15_i32 = arith.constant 15 : i32
    %139 = arith.addi %3, %c15_i32 : i32
    %140 = arith.index_cast %139 : i32 to index
    %141 = memref.load %arg2[%140] : memref<128xi32, #tpu.memory_space<smem>>
    %c0_62 = arith.constant 0 : index
    %142 = arith.index_cast %141 : i32 to index
    %c0_63 = arith.constant 0 : index
    %143 = vector.load %arg3[%c0_62, %142, %c0_63] : memref<1x16x256xf32, #tpu.memory_space<vmem>>, vector<1x1x256xf32>
    %144 = vector.shape_cast %143 : vector<1x1x256xf32> to vector<1x256xf32>
    %c0_64 = arith.constant 0 : index
    %c15 = arith.constant 15 : index
    %c0_65 = arith.constant 0 : index
    %145 = vector.load %arg4[%c0_64, %c15, %c0_65] : memref<1x32x256xf32, #tpu.memory_space<vmem>>, vector<1x1x256xf32>
    %146 = vector.shape_cast %145 : vector<1x1x256xf32> to vector<1x256xf32>
    %147 = vector.shape_cast %144 : vector<1x256xf32> to vector<1x1x256xf32>
    tpu.vector_store %arg4[%c0_64, %c15, %c0_65], %147 {strides = array<i32>} : memref<1x32x256xf32, #tpu.memory_space<vmem>>, vector<1x1x256xf32>,
    %c16_i32_66 = arith.constant 16 : i32
    %148 = arith.addi %3, %c16_i32_66 : i32
    %149 = arith.index_cast %148 : i32 to index
    %150 = memref.load %arg2[%149] : memref<128xi32, #tpu.memory_space<smem>>
    %c0_67 = arith.constant 0 : index
    %151 = arith.index_cast %150 : i32 to index
    %c0_68 = arith.constant 0 : index
    %152 = vector.load %arg3[%c0_67, %151, %c0_68] : memref<1x16x256xf32, #tpu.memory_space<vmem>>, vector<1x1x256xf32>
    %153 = vector.shape_cast %152 : vector<1x1x256xf32> to vector<1x256xf32>
    %c0_69 = arith.constant 0 : index
    %c16 = arith.constant 16 : index
    %c0_70 = arith.constant 0 : index
    %154 = vector.load %arg4[%c0_69, %c16, %c0_70] : memref<1x32x256xf32, #tpu.memory_space<vmem>>, vector<1x1x256xf32>
    %155 = vector.shape_cast %154 : vector<1x1x256xf32> to vector<1x256xf32>
    %156 = vector.shape_cast %153 : vector<1x256xf32> to vector<1x1x256xf32>
    tpu.vector_store %arg4[%c0_69, %c16, %c0_70], %156 {strides = array<i32>} : memref<1x32x256xf32, #tpu.memory_space<vmem>>, vector<1x1x256xf32>,
    %c17_i32 = arith.constant 17 : i32
    %157 = arith.addi %3, %c17_i32 : i32
    %158 = arith.index_cast %157 : i32 to index
    %159 = memref.load %arg2[%158] : memref<128xi32, #tpu.memory_space<smem>>
    %c0_71 = arith.constant 0 : index
    %160 = arith.index_cast %159 : i32 to index
    %c0_72 = arith.constant 0 : index
    %161 = vector.load %arg3[%c0_71, %160, %c0_72] : memref<1x16x256xf32, #tpu.memory_space<vmem>>, vector<1x1x256xf32>
    %162 = vector.shape_cast %161 : vector<1x1x256xf32> to vector<1x256xf32>
    %c0_73 = arith.constant 0 : index
    %c17 = arith.constant 17 : index
    %c0_74 = arith.constant 0 : index
    %163 = vector.load %arg4[%c0_73, %c17, %c0_74] : memref<1x32x256xf32, #tpu.memory_space<vmem>>, vector<1x1x256xf32>
    %164 = vector.shape_cast %163 : vector<1x1x256xf32> to vector<1x256xf32>
    %165 = vector.shape_cast %162 : vector<1x256xf32> to vector<1x1x256xf32>
    tpu.vector_store %arg4[%c0_73, %c17, %c0_74], %165 {strides = array<i32>} : memref<1x32x256xf32, #tpu.memory_space<vmem>>, vector<1x1x256xf32>,
    %c18_i32 = arith.constant 18 : i32
    %166 = arith.addi %3, %c18_i32 : i32
    %167 = arith.index_cast %166 : i32 to index
    %168 = memref.load %arg2[%167] : memref<128xi32, #tpu.memory_space<smem>>
    %c0_75 = arith.constant 0 : index
    %169 = arith.index_cast %168 : i32 to index
    %c0_76 = arith.constant 0 : index
    %170 = vector.load %arg3[%c0_75, %169, %c0_76] : memref<1x16x256xf32, #tpu.memory_space<vmem>>, vector<1x1x256xf32>
    %171 = vector.shape_cast %170 : vector<1x1x256xf32> to vector<1x256xf32>
    %c0_77 = arith.constant 0 : index
    %c18 = arith.constant 18 : index
    %c0_78 = arith.constant 0 : index
    %172 = vector.load %arg4[%c0_77, %c18, %c0_78] : memref<1x32x256xf32, #tpu.memory_space<vmem>>, vector<1x1x256xf32>
    %173 = vector.shape_cast %172 : vector<1x1x256xf32> to vector<1x256xf32>
    %174 = vector.shape_cast %171 : vector<1x256xf32> to vector<1x1x256xf32>
    tpu.vector_store %arg4[%c0_77, %c18, %c0_78], %174 {strides = array<i32>} : memref<1x32x256xf32, #tpu.memory_space<vmem>>, vector<1x1x256xf32>,
    %c19_i32 = arith.constant 19 : i32
    %175 = arith.addi %3, %c19_i32 : i32
    %176 = arith.index_cast %175 : i32 to index
    %177 = memref.load %arg2[%176] : memref<128xi32, #tpu.memory_space<smem>>
    %c0_79 = arith.constant 0 : index
    %178 = arith.index_cast %177 : i32 to index
    %c0_80 = arith.constant 0 : index
    %179 = vector.load %arg3[%c0_79, %178, %c0_80] : memref<1x16x256xf32, #tpu.memory_space<vmem>>, vector<1x1x256xf32>
    %180 = vector.shape_cast %179 : vector<1x1x256xf32> to vector<1x256xf32>
    %c0_81 = arith.constant 0 : index
    %c19 = arith.constant 19 : index
    %c0_82 = arith.constant 0 : index
    %181 = vector.load %arg4[%c0_81, %c19, %c0_82] : memref<1x32x256xf32, #tpu.memory_space<vmem>>, vector<1x1x256xf32>
    %182 = vector.shape_cast %181 : vector<1x1x256xf32> to vector<1x256xf32>
    %183 = vector.shape_cast %180 : vector<1x256xf32> to vector<1x1x256xf32>
    tpu.vector_store %arg4[%c0_81, %c19, %c0_82], %183 {strides = array<i32>} : memref<1x32x256xf32, #tpu.memory_space<vmem>>, vector<1x1x256xf32>,
    %c20_i32 = arith.constant 20 : i32
    %184 = arith.addi %3, %c20_i32 : i32
    %185 = arith.index_cast %184 : i32 to index
    %186 = memref.load %arg2[%185] : memref<128xi32, #tpu.memory_space<smem>>
    %c0_83 = arith.constant 0 : index
    %187 = arith.index_cast %186 : i32 to index
    %c0_84 = arith.constant 0 : index
    %188 = vector.load %arg3[%c0_83, %187, %c0_84] : memref<1x16x256xf32, #tpu.memory_space<vmem>>, vector<1x1x256xf32>
    %189 = vector.shape_cast %188 : vector<1x1x256xf32> to vector<1x256xf32>
    %c0_85 = arith.constant 0 : index
    %c20 = arith.constant 20 : index
    %c0_86 = arith.constant 0 : index
    %190 = vector.load %arg4[%c0_85, %c20, %c0_86] : memref<1x32x256xf32, #tpu.memory_space<vmem>>, vector<1x1x256xf32>
    %191 = vector.shape_cast %190 : vector<1x1x256xf32> to vector<1x256xf32>
    %192 = vector.shape_cast %189 : vector<1x256xf32> to vector<1x1x256xf32>
    tpu.vector_store %arg4[%c0_85, %c20, %c0_86], %192 {strides = array<i32>} : memref<1x32x256xf32, #tpu.memory_space<vmem>>, vector<1x1x256xf32>,
    %c21_i32 = arith.constant 21 : i32
    %193 = arith.addi %3, %c21_i32 : i32
    %194 = arith.index_cast %193 : i32 to index
    %195 = memref.load %arg2[%194] : memref<128xi32, #tpu.memory_space<smem>>
    %c0_87 = arith.constant 0 : index
    %196 = arith.index_cast %195 : i32 to index
    %c0_88 = arith.constant 0 : index
    %197 = vector.load %arg3[%c0_87, %196, %c0_88] : memref<1x16x256xf32, #tpu.memory_space<vmem>>, vector<1x1x256xf32>
    %198 = vector.shape_cast %197 : vector<1x1x256xf32> to vector<1x256xf32>
    %c0_89 = arith.constant 0 : index
    %c21 = arith.constant 21 : index
    %c0_90 = arith.constant 0 : index
    %199 = vector.load %arg4[%c0_89, %c21, %c0_90] : memref<1x32x256xf32, #tpu.memory_space<vmem>>, vector<1x1x256xf32>
    %200 = vector.shape_cast %199 : vector<1x1x256xf32> to vector<1x256xf32>
    %201 = vector.shape_cast %198 : vector<1x256xf32> to vector<1x1x256xf32>
    tpu.vector_store %arg4[%c0_89, %c21, %c0_90], %201 {strides = array<i32>} : memref<1x32x256xf32, #tpu.memory_space<vmem>>, vector<1x1x256xf32>,
    %c22_i32 = arith.constant 22 : i32
    %202 = arith.addi %3, %c22_i32 : i32
    %203 = arith.index_cast %202 : i32 to index
    %204 = memref.load %arg2[%203] : memref<128xi32, #tpu.memory_space<smem>>
    %c0_91 = arith.constant 0 : index
    %205 = arith.index_cast %204 : i32 to index
    %c0_92 = arith.constant 0 : index
    %206 = vector.load %arg3[%c0_91, %205, %c0_92] : memref<1x16x256xf32, #tpu.memory_space<vmem>>, vector<1x1x256xf32>
    %207 = vector.shape_cast %206 : vector<1x1x256xf32> to vector<1x256xf32>
    %c0_93 = arith.constant 0 : index
    %c22 = arith.constant 22 : index
    %c0_94 = arith.constant 0 : index
    %208 = vector.load %arg4[%c0_93, %c22, %c0_94] : memref<1x32x256xf32, #tpu.memory_space<vmem>>, vector<1x1x256xf32>
    %209 = vector.shape_cast %208 : vector<1x1x256xf32> to vector<1x256xf32>
    %210 = vector.shape_cast %207 : vector<1x256xf32> to vector<1x1x256xf32>
    tpu.vector_store %arg4[%c0_93, %c22, %c0_94], %210 {strides = array<i32>} : memref<1x32x256xf32, #tpu.memory_space<vmem>>, vector<1x1x256xf32>,
    %c23_i32 = arith.constant 23 : i32
    %211 = arith.addi %3, %c23_i32 : i32
    %212 = arith.index_cast %211 : i32 to index
    %213 = memref.load %arg2[%212] : memref<128xi32, #tpu.memory_space<smem>>
    %c0_95 = arith.constant 0 : index
    %214 = arith.index_cast %213 : i32 to index
    %c0_96 = arith.constant 0 : index
    %215 = vector.load %arg3[%c0_95, %214, %c0_96] : memref<1x16x256xf32, #tpu.memory_space<vmem>>, vector<1x1x256xf32>
    %216 = vector.shape_cast %215 : vector<1x1x256xf32> to vector<1x256xf32>
    %c0_97 = arith.constant 0 : index
    %c23 = arith.constant 23 : index
    %c0_98 = arith.constant 0 : index
    %217 = vector.load %arg4[%c0_97, %c23, %c0_98] : memref<1x32x256xf32, #tpu.memory_space<vmem>>, vector<1x1x256xf32>
    %218 = vector.shape_cast %217 : vector<1x1x256xf32> to vector<1x256xf32>
    %219 = vector.shape_cast %216 : vector<1x256xf32> to vector<1x1x256xf32>
    tpu.vector_store %arg4[%c0_97, %c23, %c0_98], %219 {strides = array<i32>} : memref<1x32x256xf32, #tpu.memory_space<vmem>>, vector<1x1x256xf32>,
    %c24_i32 = arith.constant 24 : i32
    %220 = arith.addi %3, %c24_i32 : i32
    %221 = arith.index_cast %220 : i32 to index
    %222 = memref.load %arg2[%221] : memref<128xi32, #tpu.memory_space<smem>>
    %c0_99 = arith.constant 0 : index
    %223 = arith.index_cast %222 : i32 to index
    %c0_100 = arith.constant 0 : index
    %224 = vector.load %arg3[%c0_99, %223, %c0_100] : memref<1x16x256xf32, #tpu.memory_space<vmem>>, vector<1x1x256xf32>
    %225 = vector.shape_cast %224 : vector<1x1x256xf32> to vector<1x256xf32>
    %c0_101 = arith.constant 0 : index
    %c24 = arith.constant 24 : index
    %c0_102 = arith.constant 0 : index
    %226 = vector.load %arg4[%c0_101, %c24, %c0_102] : memref<1x32x256xf32, #tpu.memory_space<vmem>>, vector<1x1x256xf32>
    %227 = vector.shape_cast %226 : vector<1x1x256xf32> to vector<1x256xf32>
    %228 = vector.shape_cast %225 : vector<1x256xf32> to vector<1x1x256xf32>
    tpu.vector_store %arg4[%c0_101, %c24, %c0_102], %228 {strides = array<i32>} : memref<1x32x256xf32, #tpu.memory_space<vmem>>, vector<1x1x256xf32>,
    %c25_i32 = arith.constant 25 : i32
    %229 = arith.addi %3, %c25_i32 : i32
    %230 = arith.index_cast %229 : i32 to index
    %231 = memref.load %arg2[%230] : memref<128xi32, #tpu.memory_space<smem>>
    %c0_103 = arith.constant 0 : index
    %232 = arith.index_cast %231 : i32 to index
    %c0_104 = arith.constant 0 : index
    %233 = vector.load %arg3[%c0_103, %232, %c0_104] : memref<1x16x256xf32, #tpu.memory_space<vmem>>, vector<1x1x256xf32>
    %234 = vector.shape_cast %233 : vector<1x1x256xf32> to vector<1x256xf32>
    %c0_105 = arith.constant 0 : index
    %c25 = arith.constant 25 : index
    %c0_106 = arith.constant 0 : index
    %235 = vector.load %arg4[%c0_105, %c25, %c0_106] : memref<1x32x256xf32, #tpu.memory_space<vmem>>, vector<1x1x256xf32>
    %236 = vector.shape_cast %235 : vector<1x1x256xf32> to vector<1x256xf32>
    %237 = vector.shape_cast %234 : vector<1x256xf32> to vector<1x1x256xf32>
    tpu.vector_store %arg4[%c0_105, %c25, %c0_106], %237 {strides = array<i32>} : memref<1x32x256xf32, #tpu.memory_space<vmem>>, vector<1x1x256xf32>,
    %c26_i32 = arith.constant 26 : i32
    %238 = arith.addi %3, %c26_i32 : i32
    %239 = arith.index_cast %238 : i32 to index
    %240 = memref.load %arg2[%239] : memref<128xi32, #tpu.memory_space<smem>>
    %c0_107 = arith.constant 0 : index
    %241 = arith.index_cast %240 : i32 to index
    %c0_108 = arith.constant 0 : index
    %242 = vector.load %arg3[%c0_107, %241, %c0_108] : memref<1x16x256xf32, #tpu.memory_space<vmem>>, vector<1x1x256xf32>
    %243 = vector.shape_cast %242 : vector<1x1x256xf32> to vector<1x256xf32>
    %c0_109 = arith.constant 0 : index
    %c26 = arith.constant 26 : index
    %c0_110 = arith.constant 0 : index
    %244 = vector.load %arg4[%c0_109, %c26, %c0_110] : memref<1x32x256xf32, #tpu.memory_space<vmem>>, vector<1x1x256xf32>
    %245 = vector.shape_cast %244 : vector<1x1x256xf32> to vector<1x256xf32>
    %246 = vector.shape_cast %243 : vector<1x256xf32> to vector<1x1x256xf32>
    tpu.vector_store %arg4[%c0_109, %c26, %c0_110], %246 {strides = array<i32>} : memref<1x32x256xf32, #tpu.memory_space<vmem>>, vector<1x1x256xf32>,
    %c27_i32 = arith.constant 27 : i32
    %247 = arith.addi %3, %c27_i32 : i32
    %248 = arith.index_cast %247 : i32 to index
    %249 = memref.load %arg2[%248] : memref<128xi32, #tpu.memory_space<smem>>
    %c0_111 = arith.constant 0 : index
    %250 = arith.index_cast %249 : i32 to index
    %c0_112 = arith.constant 0 : index
    %251 = vector.load %arg3[%c0_111, %250, %c0_112] : memref<1x16x256xf32, #tpu.memory_space<vmem>>, vector<1x1x256xf32>
    %252 = vector.shape_cast %251 : vector<1x1x256xf32> to vector<1x256xf32>
    %c0_113 = arith.constant 0 : index
    %c27 = arith.constant 27 : index
    %c0_114 = arith.constant 0 : index
    %253 = vector.load %arg4[%c0_113, %c27, %c0_114] : memref<1x32x256xf32, #tpu.memory_space<vmem>>, vector<1x1x256xf32>
    %254 = vector.shape_cast %253 : vector<1x1x256xf32> to vector<1x256xf32>
    %255 = vector.shape_cast %252 : vector<1x256xf32> to vector<1x1x256xf32>
    tpu.vector_store %arg4[%c0_113, %c27, %c0_114], %255 {strides = array<i32>} : memref<1x32x256xf32, #tpu.memory_space<vmem>>, vector<1x1x256xf32>,
    %c28_i32 = arith.constant 28 : i32
    %256 = arith.addi %3, %c28_i32 : i32
    %257 = arith.index_cast %256 : i32 to index
    %258 = memref.load %arg2[%257] : memref<128xi32, #tpu.memory_space<smem>>
    %c0_115 = arith.constant 0 : index
    %259 = arith.index_cast %258 : i32 to index
    %c0_116 = arith.constant 0 : index
    %260 = vector.load %arg3[%c0_115, %259, %c0_116] : memref<1x16x256xf32, #tpu.memory_space<vmem>>, vector<1x1x256xf32>
    %261 = vector.shape_cast %260 : vector<1x1x256xf32> to vector<1x256xf32>
    %c0_117 = arith.constant 0 : index
    %c28 = arith.constant 28 : index
    %c0_118 = arith.constant 0 : index
    %262 = vector.load %arg4[%c0_117, %c28, %c0_118] : memref<1x32x256xf32, #tpu.memory_space<vmem>>, vector<1x1x256xf32>
    %263 = vector.shape_cast %262 : vector<1x1x256xf32> to vector<1x256xf32>
    %264 = vector.shape_cast %261 : vector<1x256xf32> to vector<1x1x256xf32>
    tpu.vector_store %arg4[%c0_117, %c28, %c0_118], %264 {strides = array<i32>} : memref<1x32x256xf32, #tpu.memory_space<vmem>>, vector<1x1x256xf32>,
    %c29_i32 = arith.constant 29 : i32
    %265 = arith.addi %3, %c29_i32 : i32
    %266 = arith.index_cast %265 : i32 to index
    %267 = memref.load %arg2[%266] : memref<128xi32, #tpu.memory_space<smem>>
    %c0_119 = arith.constant 0 : index
    %268 = arith.index_cast %267 : i32 to index
    %c0_120 = arith.constant 0 : index
    %269 = vector.load %arg3[%c0_119, %268, %c0_120] : memref<1x16x256xf32, #tpu.memory_space<vmem>>, vector<1x1x256xf32>
    %270 = vector.shape_cast %269 : vector<1x1x256xf32> to vector<1x256xf32>
    %c0_121 = arith.constant 0 : index
    %c29 = arith.constant 29 : index
    %c0_122 = arith.constant 0 : index
    %271 = vector.load %arg4[%c0_121, %c29, %c0_122] : memref<1x32x256xf32, #tpu.memory_space<vmem>>, vector<1x1x256xf32>
    %272 = vector.shape_cast %271 : vector<1x1x256xf32> to vector<1x256xf32>
    %273 = vector.shape_cast %270 : vector<1x256xf32> to vector<1x1x256xf32>
    tpu.vector_store %arg4[%c0_121, %c29, %c0_122], %273 {strides = array<i32>} : memref<1x32x256xf32, #tpu.memory_space<vmem>>, vector<1x1x256xf32>,
    %c30_i32 = arith.constant 30 : i32
    %274 = arith.addi %3, %c30_i32 : i32
    %275 = arith.index_cast %274 : i32 to index
    %276 = memref.load %arg2[%275] : memref<128xi32, #tpu.memory_space<smem>>
    %c0_123 = arith.constant 0 : index
    %277 = arith.index_cast %276 : i32 to index
    %c0_124 = arith.constant 0 : index
    %278 = vector.load %arg3[%c0_123, %277, %c0_124] : memref<1x16x256xf32, #tpu.memory_space<vmem>>, vector<1x1x256xf32>
    %279 = vector.shape_cast %278 : vector<1x1x256xf32> to vector<1x256xf32>
    %c0_125 = arith.constant 0 : index
    %c30 = arith.constant 30 : index
    %c0_126 = arith.constant 0 : index
    %280 = vector.load %arg4[%c0_125, %c30, %c0_126] : memref<1x32x256xf32, #tpu.memory_space<vmem>>, vector<1x1x256xf32>
    %281 = vector.shape_cast %280 : vector<1x1x256xf32> to vector<1x256xf32>
    %282 = vector.shape_cast %279 : vector<1x256xf32> to vector<1x1x256xf32>
    tpu.vector_store %arg4[%c0_125, %c30, %c0_126], %282 {strides = array<i32>} : memref<1x32x256xf32, #tpu.memory_space<vmem>>, vector<1x1x256xf32>,
    %c31_i32 = arith.constant 31 : i32
    %283 = arith.addi %3, %c31_i32 : i32
    %284 = arith.index_cast %283 : i32 to index
    %285 = memref.load %arg2[%284] : memref<128xi32, #tpu.memory_space<smem>>
    %c0_127 = arith.constant 0 : index
    %286 = arith.index_cast %285 : i32 to index
    %c0_128 = arith.constant 0 : index
    %287 = vector.load %arg3[%c0_127, %286, %c0_128] : memref<1x16x256xf32, #tpu.memory_space<vmem>>, vector<1x1x256xf32>
    %288 = vector.shape_cast %287 : vector<1x1x256xf32> to vector<1x256xf32>
    %c0_129 = arith.constant 0 : index
    %c31 = arith.constant 31 : index
    %c0_130 = arith.constant 0 : index
    %289 = vector.load %arg4[%c0_129, %c31, %c0_130] : memref<1x32x256xf32, #tpu.memory_space<vmem>>, vector<1x1x256xf32>
    %290 = vector.shape_cast %289 : vector<1x1x256xf32> to vector<1x256xf32>
    %291 = vector.shape_cast %288 : vector<1x256xf32> to vector<1x1x256xf32>
    tpu.vector_store %arg4[%c0_129, %c31, %c0_130], %291 {strides = array<i32>} : memref<1x32x256xf32, #tpu.memory_space<vmem>>, vector<1x1x256xf32>,
    return
  }
  func.func @transform_0(%arg0: i32, %arg1: i32, %arg2: memref<128xi32, #tpu.memory_space<smem>>) -> (i32, i32, i32) {
    %c0_i32 = arith.constant 0 : i32
    %c0_i32_0 = arith.constant 0 : i32
    %c0_i32_1 = arith.constant 0 : i32
    return %arg0, %c0_i32, %c0_i32_0 : i32, i32, i32
  }
  func.func @transform_1(%arg0: i32, %arg1: i32, %arg2: memref<128xi32, #tpu.memory_space<smem>>) -> (i32, i32, i32) {
    %c0_i32 = arith.constant 0 : i32
    %c0_i32_0 = arith.constant 0 : i32
    return %arg0, %arg1, %c0_i32 : i32, i32, i32
  }
}

</mosaic_0001>

<llo_original>
// kernel: tpu_custom_call.1
$region0: #{tpu_custom_call.1}
  #allocation0 [shape = 'u32[]', space=smem, size = 0x4, offset = 0x4, fixed_abs, tag = 'smem constant byte address 0x4 - core index']
  #allocation1 [shape = 'u32[144,128]{1,0:T(1,128)}', space=vmem, size = 0x12000, scoped, tag = 'internal scratch']
  #allocation2 [shape = 's32[1]{0}', space=sflag, size = 0x4, scoped, tag = 'scoped memory for tpu_custom_call.1']
  #allocation3 [shape = 'u8[512]{0}', space=smem, size = 0x200, scoped, tag = 'prefetched SMEM operand 0']
  %s0 = inlined_call_operand.hbm [shape: s32[128], index: 0, kind: input, shape index: {}]
  %s1 = inlined_call_operand.hbm [shape: f32[2,16,256], index: 1, kind: input, shape index: {}]
  %s2 = inlined_call_operand.hbm [shape: f32[2,64,256], index: 2, kind: output, shape index: {}]
  %s3 = sld [smem:[#allocation0]]
  $region41: #{tpu_custom_call.1} parent=0
    _
  %s5 = ssub.s32 1, %s3
  %s6 = scalar_select 0, %s5, %s3
  %8 = dma.hbm_to_smem %s0, 16, [#allocation3], [#allocation2]
  %9 = dma.done [#allocation2], 16
  %10 = sfence
  $region1: #{tpu_custom_call.1} parent=0
    #allocation4 [shape = 'u8[32768]{0}', space=vmem, size = 0x8000, scoped, tag = 'input window, operand 1']
    #allocation5 [shape = 's32[2]{0}', space=sflag, size = 0x8, scoped, tag = 'scoped memory for tpu_custom_call.1']
    #allocation6 [shape = 's32[2]{0}', space=sflag, size = 0x8, scoped, tag = 'scoped memory for tpu_custom_call.1']
    #allocation7 [shape = 'u8[65536]{0}', space=vmem, size = 0x10000, scoped, tag = 'output window, operand 0']
    %11 = vsyncpa [#allocation5], 0
    %s12 = scalar_lea.sflag [#allocation5], 1
    %13 = vsyncpa %s12, 0
    %14 = vsyncpa [#allocation6], 0
    %s15 = scalar_lea.sflag [#allocation6], 1
    %16 = vsyncpa %s15, 0
    loop: start=0, step=1, limit=6
    $region2: #{tpu_custom_call.1} parent=1 // loop_pre_header
      _
    $region3: #{tpu_custom_call.1} parent=1 // loop_header
      %s18 = sphi 0, %s22
      %p19 = scmp.ge.s32.totalorder %s18, 6
      %s25 = sphi 0, %s37
      %s26 = sphi 0, %s33
      %s27 = sphi 0, %s25
      %s28 = sphi 0, %s26
      %s29 = sphi 0, %s27
      %s30 = sphi 0, %s28
      %s40 = sphi 0, %s42
      %s43 = sphi 0, %s40
      %s44 = sphi 0, %s43
      %s60 = sphi 0, %s44
      %s68 = sphi 0, %s70
      %s71 = sphi 0, %s68
      %s72 = sphi 0, %s71
      %s88 = sphi 0, %s72
    $region4: #{tpu_custom_call.1} parent=1 // loop_header_branch
      %21 = sbr.rel (%p19) target = $region8
    $region5: #{tpu_custom_call.1} parent=1 // loop_body
      %s23 = ssub.s32 %s18, 1
      %s24 = ssub.s32 %s18, 2
      %s31 = sadd.s32 1, %s26
      %p32 = scmp.ge.s32.totalorder %s31, 2
      %s33 = scalar_select %p32, 0, %s31
      %s34 = sadd.s32 1, %s25
      %s35 = scalar_select %p32, %s34, %s25
      %p36 = scmp.ge.s32.totalorder %s35, 2
      %s37 = scalar_select %p36, 0, %s35
      %s38 = ssub.s32 %s25, %s37
      %p39 = scmp.eq.s32.totalorder %s38, 0
      %s41 = sadd.s32 %s40, 1
      %s42 = scalar_select %p39, %s40, %s41
      %p45 = pneg %p39
      %p46 = scmp.eq.s32.totalorder %s18, 3
      %p47 = por %p45, %p46
      %p48 = scmp.ne.s32.totalorder %s40, %s43
      %p49 = scmp.eq.s32.totalorder %s18, 0
      %p50 = por %p48, %p49
      %p51 = scmp.ne.s32.totalorder %s40, %s43
      %p52 = scmp.eq.s32.totalorder %s23, 3
      %p53 = por %p51, %p52
      %p54 = scmp.ne.s32.totalorder %s43, %s44
      %p55 = scmp.eq.s32.totalorder %s23, 0
      %p56 = por %p54, %p55
      %p57 = scmp.ne.s32.totalorder %s43, %s44
      %p58 = scmp.eq.s32.totalorder %s24, 3
      %p59 = por %p57, %p58
      %p61 = scmp.ne.s32.totalorder %s44, %s60
      %p62 = scmp.eq.s32.totalorder %s24, 0
      %p63 = por %p61, %p62
      %s64 = ssub.s32 %s25, %s37
      %s65 = ssub.s32 %s26, %s33
      %s66 = sor.u32 %s64, %s65
      %p67 = scmp.eq.s32.totalorder %s66, 0
      %s69 = sadd.s32 %s68, 1
      %s70 = scalar_select %p67, %s68, %s69
      %p73 = pneg %p67
      %p74 = scmp.eq.s32.totalorder %s18, 3
      %p75 = por %p73, %p74
      %p76 = scmp.ne.s32.totalorder %s68, %s71
      %p77 = scmp.eq.s32.totalorder %s18, 0
      %p78 = por %p76, %p77
      %p79 = scmp.ne.s32.totalorder %s68, %s71
      %p80 = scmp.eq.s32.totalorder %s23, 3
      %p81 = por %p79, %p80
      %p82 = scmp.ne.s32.totalorder %s71, %s72
      %p83 = scmp.eq.s32.totalorder %s23, 0
      %p84 = por %p82, %p83
      %p85 = scmp.ne.s32.totalorder %s71, %s72
      %p86 = scmp.eq.s32.totalorder %s24, 3
      %p87 = por %p85, %p86
      %p89 = scmp.ne.s32.totalorder %s72, %s88
      %p90 = scmp.eq.s32.totalorder %s24, 0
      %p91 = por %p89, %p90
      %p92 = scmp.le.s32.totalorder 1, %s18
      %p93 = scmp.lt.s32.totalorder %s18, 5
      %p94 = pnand %p92, %p93
      %p95 = pneg %p94
      // Predicated region
      $region9: #{tpu_custom_call.1} parent=5 // pred_check
        _
      $region10: #{tpu_custom_call.1} parent=5 // pred_check_branch
        %97 = sbr.rel (%p94) target = $region12
      $region11: #{tpu_custom_call.1} parent=5 // pred_region
        %s98 = ssub.s32 %s18, 1
      $region12: #{tpu_custom_call.1} parent=5 // pred_fallthru
        _
      %p99 = scmp.lt.s32.totalorder %s18, 4
      // Predicated region
      $region13: #{tpu_custom_call.1} parent=5 // pred_check
        %p100 = pneg %p99
      $region14: #{tpu_custom_call.1} parent=5 // pred_check_branch
        %102 = sbr.rel (%p100) target = $region16
      $region15: #{tpu_custom_call.1} parent=5 // pred_region
        // Predicated region
        $region17: #{tpu_custom_call.1} parent=15 // pred_check
          %p103 = pneg %p50
        $region18: #{tpu_custom_call.1} parent=15 // pred_check_branch
          %105 = sbr.rel (%p103) target = $region20
        $region19: #{tpu_custom_call.1} parent=15 // pred_region
          %s106 = sand.u32 %s40, 1
          %s107 = scalar_lea.sflag [#allocation5], %s106
          %s108 = sand.u32 %s40, 1
          %s109 = smul.addr %s108, 32
          %s110 = scalar_lea.vmem [#allocation4], %s109
          %s112 = ssub.s32 512, 512
          %113 = vsyncadd %s107, %s112
          %s114 = smul.addr %s25, 4
          %s115 = smul.addr %s114, 128
          %s116 = scalar_lea.hbm %s1, %s115
          %s117 = sshll.u32 %s110, 4
          %s118 = int_to_ptr.vmem [resolvable:$true] %s117
          %123 = dma.hbm_to_vmem [thread:$0]  %s116, 512, %s118, %s107, 256, 256, 16
        $region20: #{tpu_custom_call.1} parent=15 // pred_fallthru
          _
      $region16: #{tpu_custom_call.1} parent=5 // pred_fallthru
        _
      %p124 = scmp.le.s32.totalorder 1, %s18
      %p125 = scmp.lt.s32.totalorder %s18, 5
      %p126 = pnand %p124, %p125
      %p127 = pneg %p126
      // Predicated region
      $region21: #{tpu_custom_call.1} parent=5 // pred_check
        _
      $region22: #{tpu_custom_call.1} parent=5 // pred_check_branch
        %129 = sbr.rel (%p126) target = $region24
      $region23: #{tpu_custom_call.1} parent=5 // pred_region
        %s130 = ssub.s32 %s18, 1
        %s131 = sand.u32 %s43, 1
        %s132 = scalar_lea.sflag [#allocation5], %s131
        %s133 = sand.u32 %s43, 1
        %s134 = smul.addr %s133, 32
        %s135 = scalar_lea.vmem [#allocation4], %s134
        // Predicated region
        $region25: #{tpu_custom_call.1} parent=23 // pred_check
          %p136 = pneg %p56
        $region26: #{tpu_custom_call.1} parent=23 // pred_check_branch
          %138 = sbr.rel (%p136) target = $region28
        $region27: #{tpu_custom_call.1} parent=23 // pred_region
          %139 = dma.done %s132, 512
        $region28: #{tpu_custom_call.1} parent=23 // pred_fallthru
          _
        %s140 = sand.u32 %s43, 1
        %s141 = scalar_lea.sflag [#allocation5], %s140
        %s142 = sand.u32 %s43, 1
        %s143 = smul.addr %s142, 32
        %s144 = scalar_lea.vmem [#allocation4], %s143
        %p145 = pneg %p56
        %p146 = pneg %p53
        %p147 = pneg %p84
        %p148 = pneg %p81
        %s149 = sand.u32 %s71, 1
        %s150 = scalar_lea.sflag [#allocation6], %s149
        %s151 = sand.u32 %s71, 1
        %s152 = smul.addr %s151, 64
        %s153 = scalar_lea.vmem [#allocation7], %s152
        %s154 = smul.u32 4, %s28
        %s155 = smul.u32 %s27, 16
        %s156 = smul.u32 %s28, 8
        %s157 = sadd.s32 %s155, %s156
        %s158 = smul.u32 %s157, 4
        %s159 = sld [smem:[#allocation3 + %s158]]
        %s160 = sshra.s32 %s159, 3
        %s161 = sand.u32 %s159, 7
        %s162 = sshra.s32 %s159, 3
        %s163 = sand.u32 %s159, 7
        %s164 = smul.u32 %s160, 2
        %s165 = smul.u32 %s164, 8
        %s166 = sadd.s32 %s165, %s163
        %s167 = scalar_lea.vmem %s135, %s166 [#allocation4]
        %v168 = vld [vmem:[%s167] ss:$8 sm:$0x3]
        %v169 = vlaneseq
        %vm170 = vcmp.ge.s32.totalorder %v169, 0
        %vm171 = vcmp.lt.s32.totalorder %v169, 256
        %vm172 = vmand %vm170, %vm171
        %173 = vst.msk [vmem:[%s153] ss:$8 sm:$0x3] %vm172, %v168
        %174 = vst.msk [vmem:[%s153] ss:$8 sm:$0x0] %vm172, %v168
        %s175 = sadd.s32 %s158, 1
        %s176 = sld [smem:[#allocation3 + %s175]]
        %s177 = sshra.s32 %s176, 3
        %s178 = sand.u32 %s176, 7
        %s179 = sshra.s32 %s176, 3
        %s180 = sand.u32 %s176, 7
        %s181 = smul.u32 %s177, 2
        %s182 = smul.u32 %s181, 8
        %s183 = sadd.s32 %s182, %s180
        %s184 = scalar_lea.vmem %s135, %s183 [#allocation4]
        %v185 = vld [vmem:[%s184] ss:$8 sm:$0x3]
        %s186 = scalar_lea.vmem %s153, 1 [#allocation7]
        %187 = vst.msk [vmem:[%s186] ss:$8 sm:$0x3] %vm172, %v185
        %188 = vst.msk [vmem:[%s186] ss:$8 sm:$0x0] %vm172, %v185
        %s189 = sadd.s32 %s158, 2
        %s190 = sld [smem:[#allocation3 + %s189]]
        %s191 = sshra.s32 %s190, 3
        %s192 = sand.u32 %s190, 7
        %s193 = sshra.s32 %s190, 3
        %s194 = sand.u32 %s190, 7
        %s195 = smul.u32 %s191, 2
        %s196 = smul.u32 %s195, 8
        %s197 = sadd.s32 %s196, %s194
        %s198 = scalar_lea.vmem %s135, %s197 [#allocation4]
        %v199 = vld [vmem:[%s198] ss:$8 sm:$0x3]
        %s200 = scalar_lea.vmem %s153, 2 [#allocation7]
        %201 = vst.msk [vmem:[%s200] ss:$8 sm:$0x3] %vm172, %v199
        %202 = vst.msk [vmem:[%s200] ss:$8 sm:$0x0] %vm172, %v199
        %s203 = sadd.s32 %s158, 3
        %s204 = sld [smem:[#allocation3 + %s203]]
        %s205 = sshra.s32 %s204, 3
        %s206 = sand.u32 %s204, 7
        %s207 = sshra.s32 %s204, 3
        %s208 = sand.u32 %s204, 7
        %s209 = smul.u32 %s205, 2
        %s210 = smul.u32 %s209, 8
        %s211 = sadd.s32 %s210, %s208
        %s212 = scalar_lea.vmem %s135, %s211 [#allocation4]
        %v213 = vld [vmem:[%s212] ss:$8 sm:$0x3]
        %s214 = scalar_lea.vmem %s153, 3 [#allocation7]
        %215 = vst.msk [vmem:[%s214] ss:$8 sm:$0x3] %vm172, %v213
        %216 = vst.msk [vmem:[%s214] ss:$8 sm:$0x0] %vm172, %v213
        %s217 = sadd.s32 %s158, 4
        %s218 = sld [smem:[#allocation3 + %s217]]
        %s219 = sshra.s32 %s218, 3
        %s220 = sand.u32 %s218, 7
        %s221 = sshra.s32 %s218, 3
        %s222 = sand.u32 %s218, 7
        %s223 = smul.u32 %s219, 2
        %s224 = smul.u32 %s223, 8
        %s225 = sadd.s32 %s224, %s222
        %s226 = scalar_lea.vmem %s135, %s225 [#allocation4]
        %v227 = vld [vmem:[%s226] ss:$8 sm:$0x3]
        %s228 = scalar_lea.vmem %s153, 4 [#allocation7]
        %229 = vst.msk [vmem:[%s228] ss:$8 sm:$0x3] %vm172, %v227
        %230 = vst.msk [vmem:[%s228] ss:$8 sm:$0x0] %vm172, %v227
        %s231 = sadd.s32 %s158, 5
        %s232 = sld [smem:[#allocation3 + %s231]]
        %s233 = sshra.s32 %s232, 3
        %s234 = sand.u32 %s232, 7
        %s235 = sshra.s32 %s232, 3
        %s236 = sand.u32 %s232, 7
        %s237 = smul.u32 %s233, 2
        %s238 = smul.u32 %s237, 8
        %s239 = sadd.s32 %s238, %s236
        %s240 = scalar_lea.vmem %s135, %s239 [#allocation4]
        %v241 = vld [vmem:[%s240] ss:$8 sm:$0x3]
        %s242 = scalar_lea.vmem %s153, 5 [#allocation7]
        %243 = vst.msk [vmem:[%s242] ss:$8 sm:$0x3] %vm172, %v241
        %244 = vst.msk [vmem:[%s242] ss:$8 sm:$0x0] %vm172, %v241
        %s245 = sadd.s32 %s158, 6
        %s246 = sld [smem:[#allocation3 + %s245]]
        %s247 = sshra.s32 %s246, 3
        %s248 = sand.u32 %s246, 7
        %s249 = sshra.s32 %s246, 3
        %s250 = sand.u32 %s246, 7
        %s251 = smul.u32 %s247, 2
        %s252 = smul.u32 %s251, 8
        %s253 = sadd.s32 %s252, %s250
        %s254 = scalar_lea.vmem %s135, %s253 [#allocation4]
        %v255 = vld [vmem:[%s254] ss:$8 sm:$0x3]
        %s256 = scalar_lea.vmem %s153, 6 [#allocation7]
        %257 = vst.msk [vmem:[%s256] ss:$8 sm:$0x3] %vm172, %v255
        %258 = vst.msk [vmem:[%s256] ss:$8 sm:$0x0] %vm172, %v255
        %s259 = sadd.s32 %s158, 7
        %s260 = sld [smem:[#allocation3 + %s259]]
        %s261 = sshra.s32 %s260, 3
        %s262 = sand.u32 %s260, 7
        %s263 = sshra.s32 %s260, 3
        %s264 = sand.u32 %s260, 7
        %s265 = smul.u32 %s261, 2
        %s266 = smul.u32 %s265, 8
        %s267 = sadd.s32 %s266, %s264
        %s268 = scalar_lea.vmem %s135, %s267 [#allocation4]
        %v269 = vld [vmem:[%s268] ss:$8 sm:$0x3]
        %s270 = scalar_lea.vmem %s153, 7 [#allocation7]
        %271 = vst.msk [vmem:[%s270] ss:$8 sm:$0x3] %vm172, %v269
        %272 = vst.msk [vmem:[%s270] ss:$8 sm:$0x0] %vm172, %v269
        %s273 = sadd.s32 %s158, 8
        %s274 = sld [smem:[#allocation3 + %s273]]
        %s275 = sshra.s32 %s274, 3
        %s276 = sand.u32 %s274, 7
        %s277 = sshra.s32 %s274, 3
        %s278 = sand.u32 %s274, 7
        %s279 = smul.u32 %s275, 2
        %s280 = smul.u32 %s279, 8
        %s281 = sadd.s32 %s280, %s278
        %s282 = scalar_lea.vmem %s135, %s281 [#allocation4]
        %v283 = vld [vmem:[%s282] ss:$8 sm:$0x3]
        %s284 = scalar_lea.vmem %s153, 16 [#allocation7]
        %285 = vst.msk [vmem:[%s284] ss:$8 sm:$0x3] %vm172, %v283
        %286 = vst.msk [vmem:[%s284] ss:$8 sm:$0x0] %vm172, %v283
        %s287 = sadd.s32 %s158, 9
        %s288 = sld [smem:[#allocation3 + %s287]]
        %s289 = sshra.s32 %s288, 3
        %s290 = sand.u32 %s288, 7
        %s291 = sshra.s32 %s288, 3
        %s292 = sand.u32 %s288, 7
        %s293 = smul.u32 %s289, 2
        %s294 = smul.u32 %s293, 8
        %s295 = sadd.s32 %s294, %s292
        %s296 = scalar_lea.vmem %s135, %s295 [#allocation4]
        %v297 = vld [vmem:[%s296] ss:$8 sm:$0x3]
        %s298 = scalar_lea.vmem %s153, 17 [#allocation7]
        %299 = vst.msk [vmem:[%s298] ss:$8 sm:$0x3] %vm172, %v297
        %300 = vst.msk [vmem:[%s298] ss:$8 sm:$0x0] %vm172, %v297
        %s301 = sadd.s32 %s158, 10
        %s302 = sld [smem:[#allocation3 + %s301]]
        %s303 = sshra.s32 %s302, 3
        %s304 = sand.u32 %s302, 7
        %s305 = sshra.s32 %s302, 3
        %s306 = sand.u32 %s302, 7
        %s307 = smul.u32 %s303, 2
        %s308 = smul.u32 %s307, 8
        %s309 = sadd.s32 %s308, %s306
        %s310 = scalar_lea.vmem %s135, %s309 [#allocation4]
        %v311 = vld [vmem:[%s310] ss:$8 sm:$0x3]
        %s312 = scalar_lea.vmem %s153, 18 [#allocation7]
        %313 = vst.msk [vmem:[%s312] ss:$8 sm:$0x3] %vm172, %v311
        %314 = vst.msk [vmem:[%s312] ss:$8 sm:$0x0] %vm172, %v311
        %s315 = sadd.s32 %s158, 11
        %s316 = sld [smem:[#allocation3 + %s315]]
        %s317 = sshra.s32 %s316, 3
        %s318 = sand.u32 %s316, 7
        %s319 = sshra.s32 %s316, 3
        %s320 = sand.u32 %s316, 7
        %s321 = smul.u32 %s317, 2
        %s322 = smul.u32 %s321, 8
        %s323 = sadd.s32 %s322, %s320
        %s324 = scalar_lea.vmem %s135, %s323 [#allocation4]
        %v325 = vld [vmem:[%s324] ss:$8 sm:$0x3]
        %s326 = scalar_lea.vmem %s153, 19 [#allocation7]
        %327 = vst.msk [vmem:[%s326] ss:$8 sm:$0x3] %vm172, %v325
        %328 = vst.msk [vmem:[%s326] ss:$8 sm:$0x0] %vm172, %v325
        %s329 = sadd.s32 %s158, 12
        %s330 = sld [smem:[#allocation3 + %s329]]
        %s331 = sshra.s32 %s330, 3
        %s332 = sand.u32 %s330, 7
        %s333 = sshra.s32 %s330, 3
        %s334 = sand.u32 %s330, 7
        %s335 = smul.u32 %s331, 2
        %s336 = smul.u32 %s335, 8
        %s337 = sadd.s32 %s336, %s334
        %s338 = scalar_lea.vmem %s135, %s337 [#allocation4]
        %v339 = vld [vmem:[%s338] ss:$8 sm:$0x3]
        %s340 = scalar_lea.vmem %s153, 20 [#allocation7]
        %341 = vst.msk [vmem:[%s340] ss:$8 sm:$0x3] %vm172, %v339
        %342 = vst.msk [vmem:[%s340] ss:$8 sm:$0x0] %vm172, %v339
        %s343 = sadd.s32 %s158, 13
        %s344 = sld [smem:[#allocation3 + %s343]]
        %s345 = sshra.s32 %s344, 3
        %s346 = sand.u32 %s344, 7
        %s347 = sshra.s32 %s344, 3
        %s348 = sand.u32 %s344, 7
        %s349 = smul.u32 %s345, 2
        %s350 = smul.u32 %s349, 8
        %s351 = sadd.s32 %s350, %s348
        %s352 = scalar_lea.vmem %s135, %s351 [#allocation4]
        %v353 = vld [vmem:[%s352] ss:$8 sm:$0x3]
        %s354 = scalar_lea.vmem %s153, 21 [#allocation7]
        %355 = vst.msk [vmem:[%s354] ss:$8 sm:$0x3] %vm172, %v353
        %356 = vst.msk [vmem:[%s354] ss:$8 sm:$0x0] %vm172, %v353
        %s357 = sadd.s32 %s158, 14
        %s358 = sld [smem:[#allocation3 + %s357]]
        %s359 = sshra.s32 %s358, 3
        %s360 = sand.u32 %s358, 7
        %s361 = sshra.s32 %s358, 3
        %s362 = sand.u32 %s358, 7
        %s363 = smul.u32 %s359, 2
        %s364 = smul.u32 %s363, 8
        %s365 = sadd.s32 %s364, %s362
        %s366 = scalar_lea.vmem %s135, %s365 [#allocation4]
        %v367 = vld [vmem:[%s366] ss:$8 sm:$0x3]
        %s368 = scalar_lea.vmem %s153, 22 [#allocation7]
        %369 = vst.msk [vmem:[%s368] ss:$8 sm:$0x3] %vm172, %v367
        %370 = vst.msk [vmem:[%s368] ss:$8 sm:$0x0] %vm172, %v367
        %s371 = sadd.s32 %s158, 15
        %s372 = sld [smem:[#allocation3 + %s371]]
        %s373 = sshra.s32 %s372, 3
        %s374 = sand.u32 %s372, 7
        %s375 = sshra.s32 %s372, 3
        %s376 = sand.u32 %s372, 7
        %s377 = smul.u32 %s373, 2
        %s378 = smul.u32 %s377, 8
        %s379 = sadd.s32 %s378, %s376
        %s380 = scalar_lea.vmem %s135, %s379 [#allocation4]
        %v381 = vld [vmem:[%s380] ss:$8 sm:$0x3]
        %s382 = scalar_lea.vmem %s153, 23 [#allocation7]
        %383 = vst.msk [vmem:[%s382] ss:$8 sm:$0x3] %vm172, %v381
        %384 = vst.msk [vmem:[%s382] ss:$8 sm:$0x0] %vm172, %v381
        %s385 = sadd.s32 %s158, 16
        %s386 = sld [smem:[#allocation3 + %s385]]
        %s387 = sshra.s32 %s386, 3
        %s388 = sand.u32 %s386, 7
        %s389 = sshra.s32 %s386, 3
        %s390 = sand.u32 %s386, 7
        %s391 = smul.u32 %s387, 2
        %s392 = smul.u32 %s391, 8
        %s393 = sadd.s32 %s392, %s390
        %s394 = scalar_lea.vmem %s135, %s393 [#allocation4]
        %v395 = vld [vmem:[%s394] ss:$8 sm:$0x3]
        %s396 = scalar_lea.vmem %s153, 32 [#allocation7]
        %397 = vst.msk [vmem:[%s396] ss:$8 sm:$0x3] %vm172, %v395
        %398 = vst.msk [vmem:[%s396] ss:$8 sm:$0x0] %vm172, %v395
        %s399 = sadd.s32 %s158, 17
        %s400 = sld [smem:[#allocation3 + %s399]]
        %s401 = sshra.s32 %s400, 3
        %s402 = sand.u32 %s400, 7
        %s403 = sshra.s32 %s400, 3
        %s404 = sand.u32 %s400, 7
        %s405 = smul.u32 %s401, 2
        %s406 = smul.u32 %s405, 8
        %s407 = sadd.s32 %s406, %s404
        %s408 = scalar_lea.vmem %s135, %s407 [#allocation4]
        %v409 = vld [vmem:[%s408] ss:$8 sm:$0x3]
        %s410 = scalar_lea.vmem %s153, 33 [#allocation7]
        %411 = vst.msk [vmem:[%s410] ss:$8 sm:$0x3] %vm172, %v409
        %412 = vst.msk [vmem:[%s410] ss:$8 sm:$0x0] %vm172, %v409
        %s413 = sadd.s32 %s158, 18
        %s414 = sld [smem:[#allocation3 + %s413]]
        %s415 = sshra.s32 %s414, 3
        %s416 = sand.u32 %s414, 7
        %s417 = sshra.s32 %s414, 3
        %s418 = sand.u32 %s414, 7
        %s419 = smul.u32 %s415, 2
        %s420 = smul.u32 %s419, 8
        %s421 = sadd.s32 %s420, %s418
        %s422 = scalar_lea.vmem %s135, %s421 [#allocation4]
        %v423 = vld [vmem:[%s422] ss:$8 sm:$0x3]
        %s424 = scalar_lea.vmem %s153, 34 [#allocation7]
        %425 = vst.msk [vmem:[%s424] ss:$8 sm:$0x3] %vm172, %v423
        %426 = vst.msk [vmem:[%s424] ss:$8 sm:$0x0] %vm172, %v423
        %s427 = sadd.s32 %s158, 19
        %s428 = sld [smem:[#allocation3 + %s427]]
        %s429 = sshra.s32 %s428, 3
        %s430 = sand.u32 %s428, 7
        %s431 = sshra.s32 %s428, 3
        %s432 = sand.u32 %s428, 7
        %s433 = smul.u32 %s429, 2
        %s434 = smul.u32 %s433, 8
        %s435 = sadd.s32 %s434, %s432
        %s436 = scalar_lea.vmem %s135, %s435 [#allocation4]
        %v437 = vld [vmem:[%s436] ss:$8 sm:$0x3]
        %s438 = scalar_lea.vmem %s153, 35 [#allocation7]
        %439 = vst.msk [vmem:[%s438] ss:$8 sm:$0x3] %vm172, %v437
        %440 = vst.msk [vmem:[%s438] ss:$8 sm:$0x0] %vm172, %v437
        %s441 = sadd.s32 %s158, 20
        %s442 = sld [smem:[#allocation3 + %s441]]
        %s443 = sshra.s32 %s442, 3
        %s444 = sand.u32 %s442, 7
        %s445 = sshra.s32 %s442, 3
        %s446 = sand.u32 %s442, 7
        %s447 = smul.u32 %s443, 2
        %s448 = smul.u32 %s447, 8
        %s449 = sadd.s32 %s448, %s446
        %s450 = scalar_lea.vmem %s135, %s449 [#allocation4]
        %v451 = vld [vmem:[%s450] ss:$8 sm:$0x3]
        %s452 = scalar_lea.vmem %s153, 36 [#allocation7]
        %453 = vst.msk [vmem:[%s452] ss:$8 sm:$0x3] %vm172, %v451
        %454 = vst.msk [vmem:[%s452] ss:$8 sm:$0x0] %vm172, %v451
        %s455 = sadd.s32 %s158, 21
        %s456 = sld [smem:[#allocation3 + %s455]]
        %s457 = sshra.s32 %s456, 3
        %s458 = sand.u32 %s456, 7
        %s459 = sshra.s32 %s456, 3
        %s460 = sand.u32 %s456, 7
        %s461 = smul.u32 %s457, 2
        %s462 = smul.u32 %s461, 8
        %s463 = sadd.s32 %s462, %s460
        %s464 = scalar_lea.vmem %s135, %s463 [#allocation4]
        %v465 = vld [vmem:[%s464] ss:$8 sm:$0x3]
        %s466 = scalar_lea.vmem %s153, 37 [#allocation7]
        %467 = vst.msk [vmem:[%s466] ss:$8 sm:$0x3] %vm172, %v465
        %468 = vst.msk [vmem:[%s466] ss:$8 sm:$0x0] %vm172, %v465
        %s469 = sadd.s32 %s158, 22
        %s470 = sld [smem:[#allocation3 + %s469]]
        %s471 = sshra.s32 %s470, 3
        %s472 = sand.u32 %s470, 7
        %s473 = sshra.s32 %s470, 3
        %s474 = sand.u32 %s470, 7
        %s475 = smul.u32 %s471, 2
        %s476 = smul.u32 %s475, 8
        %s477 = sadd.s32 %s476, %s474
        %s478 = scalar_lea.vmem %s135, %s477 [#allocation4]
        %v479 = vld [vmem:[%s478] ss:$8 sm:$0x3]
        %s480 = scalar_lea.vmem %s153, 38 [#allocation7]
        %481 = vst.msk [vmem:[%s480] ss:$8 sm:$0x3] %vm172, %v479
        %482 = vst.msk [vmem:[%s480] ss:$8 sm:$0x0] %vm172, %v479
        %s483 = sadd.s32 %s158, 23
        %s484 = sld [smem:[#allocation3 + %s483]]
        %s485 = sshra.s32 %s484, 3
        %s486 = sand.u32 %s484, 7
        %s487 = sshra.s32 %s484, 3
        %s488 = sand.u32 %s484, 7
        %s489 = smul.u32 %s485, 2
        %s490 = smul.u32 %s489, 8
        %s491 = sadd.s32 %s490, %s488
        %s492 = scalar_lea.vmem %s135, %s491 [#allocation4]
        %v493 = vld [vmem:[%s492] ss:$8 sm:$0x3]
        %s494 = scalar_lea.vmem %s153, 39 [#allocation7]
        %495 = vst.msk [vmem:[%s494] ss:$8 sm:$0x3] %vm172, %v493
        %496 = vst.msk [vmem:[%s494] ss:$8 sm:$0x0] %vm172, %v493
        %s497 = sadd.s32 %s158, 24
        %s498 = sld [smem:[#allocation3 + %s497]]
        %s499 = sshra.s32 %s498, 3
        %s500 = sand.u32 %s498, 7
        %s501 = sshra.s32 %s498, 3
        %s502 = sand.u32 %s498, 7
        %s503 = smul.u32 %s499, 2
        %s504 = smul.u32 %s503, 8
        %s505 = sadd.s32 %s504, %s502
        %s506 = scalar_lea.vmem %s135, %s505 [#allocation4]
        %v507 = vld [vmem:[%s506] ss:$8 sm:$0x3]
        %s508 = scalar_lea.vmem %s153, 48 [#allocation7]
        %509 = vst.msk [vmem:[%s508] ss:$8 sm:$0x3] %vm172, %v507
        %510 = vst.msk [vmem:[%s508] ss:$8 sm:$0x0] %vm172, %v507
        %s511 = sadd.s32 %s158, 25
        %s512 = sld [smem:[#allocation3 + %s511]]
        %s513 = sshra.s32 %s512, 3
        %s514 = sand.u32 %s512, 7
        %s515 = sshra.s32 %s512, 3
        %s516 = sand.u32 %s512, 7
        %s517 = smul.u32 %s513, 2
        %s518 = smul.u32 %s517, 8
        %s519 = sadd.s32 %s518, %s516
        %s520 = scalar_lea.vmem %s135, %s519 [#allocation4]
        %v521 = vld [vmem:[%s520] ss:$8 sm:$0x3]
        %s522 = scalar_lea.vmem %s153, 49 [#allocation7]
        %523 = vst.msk [vmem:[%s522] ss:$8 sm:$0x3] %vm172, %v521
        %524 = vst.msk [vmem:[%s522] ss:$8 sm:$0x0] %vm172, %v521
        %s525 = sadd.s32 %s158, 26
        %s526 = sld [smem:[#allocation3 + %s525]]
        %s527 = sshra.s32 %s526, 3
        %s528 = sand.u32 %s526, 7
        %s529 = sshra.s32 %s526, 3
        %s530 = sand.u32 %s526, 7
        %s531 = smul.u32 %s527, 2
        %s532 = smul.u32 %s531, 8
        %s533 = sadd.s32 %s532, %s530
        %s534 = scalar_lea.vmem %s135, %s533 [#allocation4]
        %v535 = vld [vmem:[%s534] ss:$8 sm:$0x3]
        %s536 = scalar_lea.vmem %s153, 50 [#allocation7]
        %537 = vst.msk [vmem:[%s536] ss:$8 sm:$0x3] %vm172, %v535
        %538 = vst.msk [vmem:[%s536] ss:$8 sm:$0x0] %vm172, %v535
        %s539 = sadd.s32 %s158, 27
        %s540 = sld [smem:[#allocation3 + %s539]]
        %s541 = sshra.s32 %s540, 3
        %s542 = sand.u32 %s540, 7
        %s543 = sshra.s32 %s540, 3
        %s544 = sand.u32 %s540, 7
        %s545 = smul.u32 %s541, 2
        %s546 = smul.u32 %s545, 8
        %s547 = sadd.s32 %s546, %s544
        %s548 = scalar_lea.vmem %s135, %s547 [#allocation4]
        %v549 = vld [vmem:[%s548] ss:$8 sm:$0x3]
        %s550 = scalar_lea.vmem %s153, 51 [#allocation7]
        %551 = vst.msk [vmem:[%s550] ss:$8 sm:$0x3] %vm172, %v549
        %552 = vst.msk [vmem:[%s550] ss:$8 sm:$0x0] %vm172, %v549
        %s553 = sadd.s32 %s158, 28
        %s554 = sld [smem:[#allocation3 + %s553]]
        %s555 = sshra.s32 %s554, 3
        %s556 = sand.u32 %s554, 7
        %s557 = sshra.s32 %s554, 3
        %s558 = sand.u32 %s554, 7
        %s559 = smul.u32 %s555, 2
        %s560 = smul.u32 %s559, 8
        %s561 = sadd.s32 %s560, %s558
        %s562 = scalar_lea.vmem %s135, %s561 [#allocation4]
        %v563 = vld [vmem:[%s562] ss:$8 sm:$0x3]
        %s564 = scalar_lea.vmem %s153, 52 [#allocation7]
        %565 = vst.msk [vmem:[%s564] ss:$8 sm:$0x3] %vm172, %v563
        %566 = vst.msk [vmem:[%s564] ss:$8 sm:$0x0] %vm172, %v563
        %s567 = sadd.s32 %s158, 29
        %s568 = sld [smem:[#allocation3 + %s567]]
        %s569 = sshra.s32 %s568, 3
        %s570 = sand.u32 %s568, 7
        %s571 = sshra.s32 %s568, 3
        %s572 = sand.u32 %s568, 7
        %s573 = smul.u32 %s569, 2
        %s574 = smul.u32 %s573, 8
        %s575 = sadd.s32 %s574, %s572
        %s576 = scalar_lea.vmem %s135, %s575 [#allocation4]
        %v577 = vld [vmem:[%s576] ss:$8 sm:$0x3]
        %s578 = scalar_lea.vmem %s153, 53 [#allocation7]
        %579 = vst.msk [vmem:[%s578] ss:$8 sm:$0x3] %vm172, %v577
        %580 = vst.msk [vmem:[%s578] ss:$8 sm:$0x0] %vm172, %v577
        %s581 = sadd.s32 %s158, 30
        %s582 = sld [smem:[#allocation3 + %s581]]
        %s583 = sshra.s32 %s582, 3
        %s584 = sand.u32 %s582, 7
        %s585 = sshra.s32 %s582, 3
        %s586 = sand.u32 %s582, 7
        %s587 = smul.u32 %s583, 2
        %s588 = smul.u32 %s587, 8
        %s589 = sadd.s32 %s588, %s586
        %s590 = scalar_lea.vmem %s135, %s589 [#allocation4]
        %v591 = vld [vmem:[%s590] ss:$8 sm:$0x3]
        %s592 = scalar_lea.vmem %s153, 54 [#allocation7]
        %593 = vst.msk [vmem:[%s592] ss:$8 sm:$0x3] %vm172, %v591
        %594 = vst.msk [vmem:[%s592] ss:$8 sm:$0x0] %vm172, %v591
        %s595 = sadd.s32 %s158, 31
        %s596 = sld [smem:[#allocation3 + %s595]]
        %s597 = sshra.s32 %s596, 3
        %s598 = sand.u32 %s596, 7
        %s599 = sshra.s32 %s596, 3
        %s600 = sand.u32 %s596, 7
        %s601 = smul.u32 %s597, 2
        %s602 = smul.u32 %s601, 8
        %s603 = sadd.s32 %s602, %s600
        %s604 = scalar_lea.vmem %s135, %s603 [#allocation4]
        %v605 = vld [vmem:[%s604] ss:$8 sm:$0x3]
        %s606 = scalar_lea.vmem %s153, 55 [#allocation7]
        %607 = vst.msk [vmem:[%s606] ss:$8 sm:$0x3] %vm172, %v605
        %608 = vst.msk [vmem:[%s606] ss:$8 sm:$0x0] %vm172, %v605
        %s609 = sand.u32 %s71, 1
        %s610 = scalar_lea.sflag [#allocation6], %s609
        %s611 = sand.u32 %s71, 1
        %s612 = smul.addr %s611, 64
        %s613 = scalar_lea.vmem [#allocation7], %s612
        // Predicated region
        $region29: #{tpu_custom_call.1} parent=23 // pred_check
          %p614 = pneg %p81
        $region30: #{tpu_custom_call.1} parent=23 // pred_check_branch
          %616 = sbr.rel (%p614) target = $region32
        $region31: #{tpu_custom_call.1} parent=23 // pred_region
          %s617 = smul.u32 4, %s28
          %s619 = ssub.s32 1024, 1024
          %620 = vsyncadd %s610, %s619
          %s621 = smul.addr %s617, 2
          %s622 = smul.addr %s27, 16
          %s623 = sadd.s32 %s621, %s622
          %s624 = smul.addr %s623, 128
          %s625 = scalar_lea.hbm %s2, %s624
          %s626 = sshll.u32 %s613, 4
          %s627 = int_to_ptr.vmem [resolvable:$true] %s626
          %632 = dma.vmem_to_hbm [thread:$0]  %s627, 1024, %s625, %s610, 256, 256, 16
        $region32: #{tpu_custom_call.1} parent=23 // pred_fallthru
          _
      $region24: #{tpu_custom_call.1} parent=5 // pred_fallthru
        _
      %p633 = scmp.le.s32.totalorder 2, %s18
      // Predicated region
      $region33: #{tpu_custom_call.1} parent=5 // pred_check
        %p634 = pneg %p633
      $region34: #{tpu_custom_call.1} parent=5 // pred_check_branch
        %636 = sbr.rel (%p634) target = $region36
      $region35: #{tpu_custom_call.1} parent=5 // pred_region
        %s637 = ssub.s32 %s18, 2
        // Predicated region
        $region37: #{tpu_custom_call.1} parent=35 // pred_check
          %p638 = pneg %p87
        $region38: #{tpu_custom_call.1} parent=35 // pred_check_branch
          %640 = sbr.rel (%p638) target = $region40
        $region39: #{tpu_custom_call.1} parent=35 // pred_region
          %s641 = sand.u32 %s72, 1
          %s642 = scalar_lea.sflag [#allocation6], %s641
          %s643 = sand.u32 %s72, 1
          %s644 = smul.addr %s643, 64
          %s645 = scalar_lea.vmem [#allocation7], %s644
          %646 = dma.done %s642, 1024
        $region40: #{tpu_custom_call.1} parent=35 // pred_fallthru
          _
      $region36: #{tpu_custom_call.1} parent=5 // pred_fallthru
        _
    $region6: #{tpu_custom_call.1} parent=1 // loop_footer
      %s22 = sadd.s32 1, %s18
    $region7: #{tpu_custom_call.1} parent=1 // loop_footer_branch
      %17 = sbr.rel target = $region3
    $region8: #{tpu_custom_call.1} parent=1 // loop_exit
      _
    %647 = vsyncpa [#allocation5], 1
    %s648 = scalar_lea.sflag [#allocation5], 1
    %649 = vsyncpa %s648, 1
    %650 = vsyncpa [#allocation6], 1
    %s651 = scalar_lea.sflag [#allocation6], 1
    %652 = vsyncpa %s651, 1

</llo_original>
